<compile_context>
chip_gen: v7x
topology: tpu7x:2x2x1
jax: 0.10.0
libtpu: 0.0.40
codegen_flags: <defaults>
</compile_context>

<pallas_src>
import jax
import jax.numpy as jnp
from jax import lax
from jax.experimental import pallas as pl
from jax.experimental.pallas import tpu as pltpu


def _round_up(n, m):
    return ((n + m - 1) // m) * m


def churnnet_kernel(
    x_ref,                    # (TB, input_size)   batch-major input tile
    w1_ref, b1_ref,           # (128, input_size), (128, 1)  (BN folded in)
    w2_ref, b2_ref,           # (64, 128), (64, 1)
    w3_ref, b3_ref,           # (32, 64), (32, 1)
    w4_ref, b4_ref,           # (32, 1), (1, 1)    output layer (no BN)
    out_ref,                  # (1, TB)            lane-dense output tile
):
    # Layer 1: fold the x transpose into the matmul (MXU consumes the
    # transposed RHS): w1 (128,in) . x (TB,in)^T -> (128, TB).  Result is
    # feature-major, so the batch lives on the 128-wide lane axis from here on.
    x = x_ref[...].astype(w1_ref.dtype)
    h = lax.dot_general(
        w1_ref[...], x,
        dimension_numbers=(((1,), (1,)), ((), ())),
        preferred_element_type=jnp.float32)
    h = jnp.maximum(h + b1_ref[...], 0.0)          # f32 bias + ReLU (dropout = identity)

    # Layer 2
    h = jnp.dot(w2_ref[...], h.astype(w2_ref.dtype),
                preferred_element_type=jnp.float32)
    h = jnp.maximum(h + b2_ref[...], 0.0)

    # Layer 3
    h = jnp.dot(w3_ref[...], h.astype(w3_ref.dtype),
                preferred_element_type=jnp.float32)
    h = jnp.maximum(h + b3_ref[...], 0.0)

    # Output layer Linear(32, 1): per-feature scale + cross-sublane reduce on
    # the VPU/XLU, keeping the result lane-dense as (1, TB) instead of an N=1
    # MXU matmul followed by a (TB, 1) masked store.
    out = jnp.sum(h * w4_ref[...], axis=0, keepdims=True) + b4_ref[...]
    out_ref[...] = out.astype(out_ref.dtype)


def fold_params(params, *, eps=1e-5, compute_dtype=jnp.bfloat16):
    """Fold eval-mode BatchNorm into the preceding Linear layer.

    Returns feature-major weights (out, in) in `compute_dtype` and f32 column
    biases (out, 1).  The output-layer weight is returned as (in, 1): the
    kernel applies it as a per-feature scale followed by a sublane reduction.
    """
    ws, bs = [], []
    for i in range(3):
        w, b = params["w"][i], params["b"][i]
        gamma, beta, mean, var = params["bn"][i]
        scale = gamma / jnp.sqrt(var + eps)                           # (out,)
        shift = beta - mean * scale                                   # (out,)
        ws.append((w * scale[:, None]).astype(compute_dtype))         # (out, in)
        bs.append((b * scale + shift)[:, None].astype(jnp.float32))   # (out, 1)
    # Output layer: no BN; stays f32 (it runs on the VPU, not the MXU).
    ws.append(params["w"][3].reshape(-1, 1).astype(jnp.float32))      # (32, 1)
    bs.append(params["b"][3].reshape(1, 1).astype(jnp.float32))       # (1, 1)
    return ws, bs


def churnnet_forward(x, params, *, block_b=8192, compute_dtype=jnp.bfloat16):
    """x: (B, input_size) float32. Returns (B, 1) float32 (eval-mode forward)."""
    B, input_size = x.shape
    ws, bs = fold_params(params, compute_dtype=compute_dtype)

    # Batch tile: multiple of 128 (lane width).  Large tiles amortize the
    # per-grid-step overhead; cap so there are >= 2 tiles whenever B allows it
    # so the "parallel" axis actually splits across v7x's two TensorCores.
    tb = min(_round_up(block_b, 128), _round_up(B, 128))
    b_pad_min = _round_up(B, 128)
    if b_pad_min >= 256:
        tb = min(tb, (b_pad_min // 2) // 128 * 128)
    tb = max(tb, 128)
    b_pad = _round_up(B, tb)
    if b_pad != B:
        x = jnp.pad(x, ((0, b_pad - B), (0, 0)))

    def resident(a):
        # Whole-array block with a constant index map: fetched once, stays in
        # VMEM across all batch tiles.  (Single-buffering these would save a
        # further ~50-100 KiB; not needed at current VMEM budgets.)
        return pl.BlockSpec(a.shape, lambda i: (0, 0))

    in_specs = [pl.BlockSpec((tb, input_size), lambda i: (i, 0))]   # batch-major x
    inputs = [x]
    for w, b in zip(ws, bs):
        in_specs += [resident(w), resident(b)]
        inputs += [w, b]

    # Rough per-tile VMEM budget (x tile lane-padded to 128, double-buffered;
    # f32 activations + casted MXU operands; resident params).  Used to raise
    # the scoped VMEM limit when big tiles would overshoot v5e's 16 MiB default.
    itemsize = jnp.dtype(compute_dtype).itemsize
    x_tile_bytes = tb * max(input_size, 128) * x.dtype.itemsize
    act_bytes = (128 + 64 + 32) * tb * (4 + itemsize)
    param_bytes = sum(int(a.size) * a.dtype.itemsize for a in inputs[1:])
    vmem_est = 2 * x_tile_bytes + 2 * 8 * tb * 4 + act_bytes + 2 * param_bytes
    vmem_limit = int(min(max(2 * vmem_est, 32 * 1024 * 1024), 64 * 1024 * 1024))

    out = pl.pallas_call(
        churnnet_kernel,
        out_shape=jax.ShapeDtypeStruct((1, b_pad), jnp.float32),
        grid=(b_pad // tb,),
        in_specs=in_specs,
        out_specs=pl.BlockSpec((1, tb), lambda i: (0, i)),
        compiler_params=pltpu.CompilerParams(
            dimension_semantics=("parallel",),   # megacore batch split on v7x
            vmem_limit_bytes=vmem_limit,
        ),
    )(*inputs)

    return out.reshape(b_pad, 1)[:B]


def make_params(key, input_size):
    """Deterministic synthetic parameters, PyTorch-shaped:
    W: (out, in), b: (out,), BatchNorm (gamma, beta, running_mean, running_var): (out,)."""
    dims = [(input_size, 128), (128, 64), (64, 32), (32, 1)]
    keys = iter(jax.random.split(key, 20))

    ws, bs = [], []
    for fan_in, fan_out in dims:
        bound = float(fan_in) ** -0.5
        ws.append(jax.random.uniform(next(keys), (fan_out, fan_in),
                                     minval=-bound, maxval=bound, dtype=jnp.float32))
        bs.append(jax.random.uniform(next(keys), (fan_out,),
                                     minval=-bound, maxval=bound, dtype=jnp.float32))

    bns = []
    for h in (128, 64, 32):
        gamma = 1.0 + 0.05 * jax.random.normal(next(keys), (h,), dtype=jnp.float32)
        beta = 0.05 * jax.random.normal(next(keys), (h,), dtype=jnp.float32)
        mean = 0.05 * jax.random.normal(next(keys), (h,), dtype=jnp.float32)
        var = jax.random.uniform(next(keys), (h,), minval=0.5, maxval=1.5,
                                 dtype=jnp.float32)
        bns.append((gamma, beta, mean, var))

    return {"w": ws, "b": bs, "bn": bns}


def churnnet_ref(x, params, *, eps=1e-5):
    """Pure-JAX reference of the PyTorch module's eval-mode forward pass."""
    h = x
    for i in range(3):
        w, b = params["w"][i], params["b"][i]
        gamma, beta, mean, var = params["bn"][i]
        h = h @ w.T + b
        h = (h - mean) / jnp.sqrt(var + eps) * gamma + beta
        h = jnp.maximum(h, 0.0)
    return h @ params["w"][3].T + params["b"][3]


if __name__ == "__main__":
    # TODO(synk): training-mode BatchNorm (batch statistics) and dropout sampling
    # are not implemented; this kernel reproduces the eval-mode forward pass.
    key = jax.random.PRNGKey(0)
    kx, kp = jax.random.split(key)

    batch = 8
    input_size = 16
    x = jax.random.normal(kx, (batch, input_size), dtype=jnp.float32)
    params = make_params(kp, input_size)

    ref = churnnet_ref(x, params)

    # Default path: bf16 MXU operands, f32 accumulation + f32 epilogues.
    out = jax.block_until_ready(churnnet_forward(x, params))
    assert out.shape == (batch, 1)
    assert jnp.allclose(out, ref, atol=1e-1, rtol=1e-1)

    # f32-operand path (tight tolerance).
    out_f32 = jax.block_until_ready(
        churnnet_forward(x, params, compute_dtype=jnp.float32))
    assert out_f32.shape == (batch, 1)
    assert jnp.allclose(out_f32, ref, atol=1e-3, rtol=1e-3)

    # Multi-tile path (exercises >= 2 batch tiles + padding logic).
    batch2 = 300
    x2 = jax.random.normal(kx, (batch2, input_size), dtype=jnp.float32)
    ref2 = churnnet_ref(x2, params)
    out2 = jax.block_until_ready(
        churnnet_forward(x2, params, compute_dtype=jnp.float32))
    assert out2.shape == (batch2, 1)
    assert jnp.allclose(out2, ref2, atol=1e-3, rtol=1e-3)

    print("KERNEL_OK")
</pallas_src>

<mosaic_0001>
module attributes {stable_mosaic.version = 11 : i64} {
  func.func @churnnet_kernel(%arg0: i32, %arg1: memref<128x16xf32, #tpu.memory_space<vmem>>, %arg2: memref<128x16xbf16, #tpu.memory_space<vmem>>, %arg3: memref<128x1xf32, #tpu.memory_space<vmem>>, %arg4: memref<64x128xbf16, #tpu.memory_space<vmem>>, %arg5: memref<64x1xf32, #tpu.memory_space<vmem>>, %arg6: memref<32x64xbf16, #tpu.memory_space<vmem>>, %arg7: memref<32x1xf32, #tpu.memory_space<vmem>>, %arg8: memref<32x1xf32, #tpu.memory_space<vmem>>, %arg9: memref<1x1xf32, #tpu.memory_space<vmem>>, %arg10: memref<1x128xf32, #tpu.memory_space<vmem>>) attributes {dimension_semantics = [#tpu.dimension_semantics<parallel>], iteration_bounds = array<i64: 1>, scalar_prefetch = 0 : i64, scratch_operands = 0 : i64, tpu.core_type = #tpu.core_type<tc>, window_params = [{transform_indices = @transform_0, window_bounds = array<i64: 128, 16>}, {pipeline_mode = #tpu.pipeline_mode<synchronous>, transform_indices = @transform_1, window_bounds = array<i64: 128, 16>}, {pipeline_mode = #tpu.pipeline_mode<synchronous>, transform_indices = @transform_2, window_bounds = array<i64: 128, 1>}, {pipeline_mode = #tpu.pipeline_mode<synchronous>, transform_indices = @transform_3, window_bounds = array<i64: 64, 128>}, {pipeline_mode = #tpu.pipeline_mode<synchronous>, transform_indices = @transform_4, window_bounds = array<i64: 64, 1>}, {pipeline_mode = #tpu.pipeline_mode<synchronous>, transform_indices = @transform_5, window_bounds = array<i64: 32, 64>}, {pipeline_mode = #tpu.pipeline_mode<synchronous>, transform_indices = @transform_6, window_bounds = array<i64: 32, 1>}, {pipeline_mode = #tpu.pipeline_mode<synchronous>, transform_indices = @transform_7, window_bounds = array<i64: 32, 1>}, {pipeline_mode = #tpu.pipeline_mode<synchronous>, transform_indices = @transform_8, window_bounds = array<i64: 1, 1>}, {transform_indices = @transform_9, window_bounds = array<i64: 1, 128>}]} {
    %c0 = arith.constant 0 : index
    %c0_0 = arith.constant 0 : index
    %0 = vector.load %arg1[%c0, %c0_0] : memref<128x16xf32, #tpu.memory_space<vmem>>, vector<128x16xf32>
    %1 = arith.truncf %0 : vector<128x16xf32> to vector<128x16xbf16>
    %c0_1 = arith.constant 0 : index
    %c0_2 = arith.constant 0 : index
    %2 = vector.load %arg2[%c0_1, %c0_2] : memref<128x16xbf16, #tpu.memory_space<vmem>>, vector<128x16xbf16>
    %cst = arith.constant dense<0.000000e+00> : vector<128x128xf32>
    %3 = tpu.matmul %2, %1, %cst {dimension_numbers = #tpu.dot_dimension_numbers<[1], [1], [0], [0], [0, 0, 1, 0], [], []>} : vector<128x16xbf16>, vector<128x16xbf16>, vector<128x128xf32> -> vector<128x128xf32>
    %c0_3 = arith.constant 0 : index
    %c0_4 = arith.constant 0 : index
    %4 = vector.load %arg3[%c0_3, %c0_4] : memref<128x1xf32, #tpu.memory_space<vmem>>, vector<128x1xf32>
    %5 = vector.broadcast %4 : vector<128x1xf32> to vector<128x128xf32>
    %6 = arith.addf %3, %5 : vector<128x128xf32>
    %cst_5 = arith.constant 0.000000e+00 : f32
    %7 = vector.broadcast %cst_5 : f32 to vector<128x128xf32>
    %8 = arith.maximumf %6, %7 : vector<128x128xf32>
    %c0_6 = arith.constant 0 : index
    %c0_7 = arith.constant 0 : index
    %9 = vector.load %arg4[%c0_6, %c0_7] : memref<64x128xbf16, #tpu.memory_space<vmem>>, vector<64x128xbf16>
    %10 = arith.truncf %8 : vector<128x128xf32> to vector<128x128xbf16>
    %cst_8 = arith.constant dense<0.000000e+00> : vector<64x128xf32>
    %11 = tpu.matmul %9, %10, %cst_8 {dimension_numbers = #tpu.dot_dimension_numbers<[1], [0], [0], [1], [0, 0, 1, 1], [], []>} : vector<64x128xbf16>, vector<128x128xbf16>, vector<64x128xf32> -> vector<64x128xf32>
    %c0_9 = arith.constant 0 : index
    %c0_10 = arith.constant 0 : index
    %12 = vector.load %arg5[%c0_9, %c0_10] : memref<64x1xf32, #tpu.memory_space<vmem>>, vector<64x1xf32>
    %13 = vector.broadcast %12 : vector<64x1xf32> to vector<64x128xf32>
    %14 = arith.addf %11, %13 : vector<64x128xf32>
    %cst_11 = arith.constant 0.000000e+00 : f32
    %15 = vector.broadcast %cst_11 : f32 to vector<64x128xf32>
    %16 = arith.maximumf %14, %15 : vector<64x128xf32>
    %c0_12 = arith.constant 0 : index
    %c0_13 = arith.constant 0 : index
    %17 = vector.load %arg6[%c0_12, %c0_13] : memref<32x64xbf16, #tpu.memory_space<vmem>>, vector<32x64xbf16>
    %18 = arith.truncf %16 : vector<64x128xf32> to vector<64x128xbf16>
    %cst_14 = arith.constant dense<0.000000e+00> : vector<32x128xf32>
    %19 = tpu.matmul %17, %18, %cst_14 {dimension_numbers = #tpu.dot_dimension_numbers<[1], [0], [0], [1], [0, 0, 1, 1], [], []>} : vector<32x64xbf16>, vector<64x128xbf16>, vector<32x128xf32> -> vector<32x128xf32>
    %c0_15 = arith.constant 0 : index
    %c0_16 = arith.constant 0 : index
    %20 = vector.load %arg7[%c0_15, %c0_16] : memref<32x1xf32, #tpu.memory_space<vmem>>, vector<32x1xf32>
    %21 = vector.broadcast %20 : vector<32x1xf32> to vector<32x128xf32>
    %22 = arith.addf %19, %21 : vector<32x128xf32>
    %cst_17 = arith.constant 0.000000e+00 : f32
    %23 = vector.broadcast %cst_17 : f32 to vector<32x128xf32>
    %24 = arith.maximumf %22, %23 : vector<32x128xf32>
    %c0_18 = arith.constant 0 : index
    %c0_19 = arith.constant 0 : index
    %25 = vector.load %arg8[%c0_18, %c0_19] : memref<32x1xf32, #tpu.memory_space<vmem>>, vector<32x1xf32>
    %26 = vector.broadcast %25 : vector<32x1xf32> to vector<32x128xf32>
    %27 = arith.mulf %24, %26 : vector<32x128xf32>
    %cst_20 = arith.constant dense<0.000000e+00> : vector<128xf32>
    %28 = vector.multi_reduction <add>, %27, %cst_20 [0] : vector<32x128xf32> to vector<128xf32>
    %29 = vector.shape_cast %28 : vector<128xf32> to vector<1x128xf32>
    %c0_21 = arith.constant 0 : index
    %c0_22 = arith.constant 0 : index
    %30 = vector.load %arg9[%c0_21, %c0_22] : memref<1x1xf32, #tpu.memory_space<vmem>>, vector<1x1xf32>
    %31 = vector.broadcast %30 : vector<1x1xf32> to vector<1x128xf32>
    %32 = arith.addf %29, %31 : vector<1x128xf32>
    %c0_23 = arith.constant 0 : index
    %c0_24 = arith.constant 0 : index
    %33 = vector.load %arg10[%c0_23, %c0_24] : memref<1x128xf32, #tpu.memory_space<vmem>>, vector<1x128xf32>
    tpu.vector_store %arg10[%c0_23, %c0_24], %32 {strides = array<i32>} : memref<1x128xf32, #tpu.memory_space<vmem>>, vector<1x128xf32>,
    return
  }
  func.func @transform_0(%arg0: i32) -> (i32, i32) {
    %c0_i32 = arith.constant 0 : i32
    %c0_i32_0 = arith.constant 0 : i32
    return %arg0, %c0_i32 : i32, i32
  }
  func.func @transform_1(%arg0: i32) -> (i32, i32) {
    %c0_i32 = arith.constant 0 : i32
    %c0_i32_0 = arith.constant 0 : i32
    %c0_i32_1 = arith.constant 0 : i32
    return %c0_i32, %c0_i32_0 : i32, i32
  }
  func.func @transform_2(%arg0: i32) -> (i32, i32) {
    %c0_i32 = arith.constant 0 : i32
    %c0_i32_0 = arith.constant 0 : i32
    %c0_i32_1 = arith.constant 0 : i32
    return %c0_i32, %c0_i32_0 : i32, i32
  }
  func.func @transform_3(%arg0: i32) -> (i32, i32) {
    %c0_i32 = arith.constant 0 : i32
    %c0_i32_0 = arith.constant 0 : i32
    %c0_i32_1 = arith.constant 0 : i32
    return %c0_i32, %c0_i32_0 : i32, i32
  }
  func.func @transform_4(%arg0: i32) -> (i32, i32) {
    %c0_i32 = arith.constant 0 : i32
    %c0_i32_0 = arith.constant 0 : i32
    %c0_i32_1 = arith.constant 0 : i32
    return %c0_i32, %c0_i32_0 : i32, i32
  }
  func.func @transform_5(%arg0: i32) -> (i32, i32) {
    %c0_i32 = arith.constant 0 : i32
    %c0_i32_0 = arith.constant 0 : i32
    %c0_i32_1 = arith.constant 0 : i32
    return %c0_i32, %c0_i32_0 : i32, i32
  }
  func.func @transform_6(%arg0: i32) -> (i32, i32) {
    %c0_i32 = arith.constant 0 : i32
    %c0_i32_0 = arith.constant 0 : i32
    %c0_i32_1 = arith.constant 0 : i32
    return %c0_i32, %c0_i32_0 : i32, i32
  }
  func.func @transform_7(%arg0: i32) -> (i32, i32) {
    %c0_i32 = arith.constant 0 : i32
    %c0_i32_0 = arith.constant 0 : i32
    %c0_i32_1 = arith.constant 0 : i32
    return %c0_i32, %c0_i32_0 : i32, i32
  }
  func.func @transform_8(%arg0: i32) -> (i32, i32) {
    %c0_i32 = arith.constant 0 : i32
    %c0_i32_0 = arith.constant 0 : i32
    %c0_i32_1 = arith.constant 0 : i32
    return %c0_i32, %c0_i32_0 : i32, i32
  }
  func.func @transform_9(%arg0: i32) -> (i32, i32) {
    %c0_i32 = arith.constant 0 : i32
    %c0_i32_0 = arith.constant 0 : i32
    return %c0_i32, %arg0 : i32, i32
  }
}

</mosaic_0001>

<llo_original>
// kernel: tpu_custom_call.1
$region0: #{tpu_custom_call.1}
  #allocation0 [shape = 'u32[]', space=smem, size = 0x4, offset = 0x4, fixed_abs, tag = 'smem constant byte address 0x4 - core index']
  #allocation1 [shape = 'u32[144,128]{1,0:T(1,128)}', space=vmem, size = 0x12000, scoped, tag = 'internal scratch']
  #allocation2 [shape = 'f32[1,1]{1,0:T(1,128)S(1)}', space=vmem, size = 0x200, scoped, tag = 'scoped memory for tpu_custom_call.1']
  %s0 = inlined_call_operand.vmem [shape: f32[128,16], index: 0, kind: input, shape index: {}]
  %s1 = inlined_call_operand.vmem [shape: bf16[128,16], index: 1, kind: input, shape index: {}]
  %s2 = inlined_call_operand.vmem [shape: f32[128,1], index: 2, kind: input, shape index: {}]
  %s3 = inlined_call_operand.vmem [shape: bf16[64,128], index: 3, kind: input, shape index: {}]
  %s4 = inlined_call_operand.vmem [shape: f32[64,1], index: 4, kind: input, shape index: {}]
  %s5 = inlined_call_operand.vmem [shape: bf16[32,64], index: 5, kind: input, shape index: {}]
  %s6 = inlined_call_operand.vmem [shape: f32[32,1], index: 6, kind: input, shape index: {}]
  %s7 = inlined_call_operand.vmem [shape: f32[32,1], index: 7, kind: input, shape index: {}]
  %s8 = inlined_call_operand.<no memory space> [shape: f32[1,1], index: 8, kind: input, shape index: {}]
  %s9 = inlined_call_operand.hbm [shape: f32[1,128], index: 9, kind: output, shape index: {}]
  %s10 = sld [smem:[#allocation0]]
  $region46: #{tpu_custom_call.1} parent=0
    _
  %s12 = ssub.s32 1, %s10
  %s13 = scalar_select 0, %s12, %s10
  %v14 = vstv %s8
  %15 = vst [vmem:[#allocation2] sm:$0x1] %v14
  $region1: #{tpu_custom_call.1} parent=0
    #allocation3 [shape = 'u8[512]{0}', space=vmem, size = 0x400, scoped, tag = 'output window, operand 0, single buffered']
    #allocation4 [shape = 's32[1]{0}', space=sflag, size = 0x4, scoped, tag = 'scoped memory for tpu_custom_call.1']
    %16 = vsyncpa [#allocation4], 0
    // Predicated region
    $region2: #{tpu_custom_call.1} parent=1 // pred_check
      _
    $region3: #{tpu_custom_call.1} parent=1 // pred_check_branch
      %18 = sbr.rel (0) target = $region5
    $region4: #{tpu_custom_call.1} parent=1 // pred_region
      _
    $region5: #{tpu_custom_call.1} parent=1 // pred_fallthru
      _
    // Predicated region
    $region6: #{tpu_custom_call.1} parent=1 // pred_check
      _
    $region7: #{tpu_custom_call.1} parent=1 // pred_check_branch
      %20 = sbr.rel (0) target = $region9
    $region8: #{tpu_custom_call.1} parent=1 // pred_region
      _
    $region9: #{tpu_custom_call.1} parent=1 // pred_fallthru
      _
    // Predicated region
    $region10: #{tpu_custom_call.1} parent=1 // pred_check
      _
    $region11: #{tpu_custom_call.1} parent=1 // pred_check_branch
      %22 = sbr.rel (0) target = $region13
    $region12: #{tpu_custom_call.1} parent=1 // pred_region
      _
    $region13: #{tpu_custom_call.1} parent=1 // pred_fallthru
      _
    // Predicated region
    $region14: #{tpu_custom_call.1} parent=1 // pred_check
      _
    $region15: #{tpu_custom_call.1} parent=1 // pred_check_branch
      %24 = sbr.rel (0) target = $region17
    $region16: #{tpu_custom_call.1} parent=1 // pred_region
      _
    $region17: #{tpu_custom_call.1} parent=1 // pred_fallthru
      _
    // Predicated region
    $region18: #{tpu_custom_call.1} parent=1 // pred_check
      _
    $region19: #{tpu_custom_call.1} parent=1 // pred_check_branch
      %26 = sbr.rel (0) target = $region21
    $region20: #{tpu_custom_call.1} parent=1 // pred_region
      _
    $region21: #{tpu_custom_call.1} parent=1 // pred_fallthru
      _
    // Predicated region
    $region22: #{tpu_custom_call.1} parent=1 // pred_check
      _
    $region23: #{tpu_custom_call.1} parent=1 // pred_check_branch
      %28 = sbr.rel (0) target = $region25
    $region24: #{tpu_custom_call.1} parent=1 // pred_region
      _
    $region25: #{tpu_custom_call.1} parent=1 // pred_fallthru
      _
    // Predicated region
    $region26: #{tpu_custom_call.1} parent=1 // pred_check
      _
    $region27: #{tpu_custom_call.1} parent=1 // pred_check_branch
      %30 = sbr.rel (0) target = $region29
    $region28: #{tpu_custom_call.1} parent=1 // pred_region
      _
    $region29: #{tpu_custom_call.1} parent=1 // pred_fallthru
      _
    // Predicated region
    $region30: #{tpu_custom_call.1} parent=1 // pred_check
      _
    $region31: #{tpu_custom_call.1} parent=1 // pred_check_branch
      %32 = sbr.rel (0) target = $region33
    $region32: #{tpu_custom_call.1} parent=1 // pred_region
      _
    $region33: #{tpu_custom_call.1} parent=1 // pred_fallthru
      _
    // Predicated region
    $region34: #{tpu_custom_call.1} parent=1 // pred_check
      _
    $region35: #{tpu_custom_call.1} parent=1 // pred_check_branch
      %34 = sbr.rel (0) target = $region37
    $region36: #{tpu_custom_call.1} parent=1 // pred_region
      _
    $region37: #{tpu_custom_call.1} parent=1 // pred_fallthru
      _
    %v36 = vld [vmem:[%s0] sm:$0xff]
    %v37 = vld [vmem:[%s0 + $0x8] sm:$0xff]
    %v38 = vld [vmem:[%s0 + $0x10] sm:$0xff]
    %v39 = vld [vmem:[%s0 + $0x18] sm:$0xff]
    %v40 = vld [vmem:[%s0 + $0x20] sm:$0xff]
    %v41 = vld [vmem:[%s0 + $0x28] sm:$0xff]
    %v42 = vld [vmem:[%s0 + $0x30] sm:$0xff]
    %v43 = vld [vmem:[%s0 + $0x38] sm:$0xff]
    %v44 = vld [vmem:[%s0 + $0x40] sm:$0xff]
    %v45 = vld [vmem:[%s0 + $0x48] sm:$0xff]
    %v46 = vld [vmem:[%s0 + $0x50] sm:$0xff]
    %v47 = vld [vmem:[%s0 + $0x58] sm:$0xff]
    %v48 = vld [vmem:[%s0 + $0x60] sm:$0xff]
    %v49 = vld [vmem:[%s0 + $0x68] sm:$0xff]
    %v50 = vld [vmem:[%s0 + $0x70] sm:$0xff]
    %v51 = vld [vmem:[%s0 + $0x78] sm:$0xff]
    %v52 = vpack.c.bf16 %v37, %v36
    %v53 = vpack.c.bf16 %v39, %v38
    %v54 = vpack.c.bf16 %v41, %v40
    %v55 = vpack.c.bf16 %v43, %v42
    %v56 = vpack.c.bf16 %v45, %v44
    %v57 = vpack.c.bf16 %v47, %v46
    %v58 = vpack.c.bf16 %v49, %v48
    %v59 = vpack.c.bf16 %v51, %v50
    %v60 = vld [vmem:[%s1] sm:$0xf]
    %v61 = vld [vmem:[%s1 + $0x4] sm:$0xf]
    %v62 = vld [vmem:[%s1 + $0x8] sm:$0xf]
    %v63 = vld [vmem:[%s1 + $0xc] sm:$0xf]
    %v64 = vld [vmem:[%s1 + $0x10] sm:$0xf]
    %v65 = vld [vmem:[%s1 + $0x14] sm:$0xf]
    %v66 = vld [vmem:[%s1 + $0x18] sm:$0xf]
    %v67 = vld [vmem:[%s1 + $0x1c] sm:$0xf]
    %v68 = vld [vmem:[%s1 + $0x20] sm:$0xf]
    %v69 = vld [vmem:[%s1 + $0x24] sm:$0xf]
    %v70 = vld [vmem:[%s1 + $0x28] sm:$0xf]
    %v71 = vld [vmem:[%s1 + $0x2c] sm:$0xf]
    %v72 = vld [vmem:[%s1 + $0x30] sm:$0xf]
    %v73 = vld [vmem:[%s1 + $0x34] sm:$0xf]
    %v74 = vld [vmem:[%s1 + $0x38] sm:$0xf]
    %v75 = vld [vmem:[%s1 + $0x3c] sm:$0xf]
    %v76 = vld [vmem:[%s2] sm:$0xff]
    %v77 = vld [vmem:[%s2 + $0x8] sm:$0xff]
    %v78 = vld [vmem:[%s2 + $0x10] sm:$0xff]
    %v79 = vld [vmem:[%s2 + $0x18] sm:$0xff]
    %v80 = vld [vmem:[%s2 + $0x20] sm:$0xff]
    %v81 = vld [vmem:[%s2 + $0x28] sm:$0xff]
    %v82 = vld [vmem:[%s2 + $0x30] sm:$0xff]
    %v83 = vld [vmem:[%s2 + $0x38] sm:$0xff]
    %v84 = vld [vmem:[%s2 + $0x40] sm:$0xff]
    %v85 = vld [vmem:[%s2 + $0x48] sm:$0xff]
    %v86 = vld [vmem:[%s2 + $0x50] sm:$0xff]
    %v87 = vld [vmem:[%s2 + $0x58] sm:$0xff]
    %v88 = vld [vmem:[%s2 + $0x60] sm:$0xff]
    %v89 = vld [vmem:[%s2 + $0x68] sm:$0xff]
    %v90 = vld [vmem:[%s2 + $0x70] sm:$0xff]
    %v91 = vld [vmem:[%s2 + $0x78] sm:$0xff]
    %93 = vset.pattern.permute.xlu0 0
    %94 = vperm.xlu0 %93, %v76
    %v95 = vpop.permute.xlu0 %94
    %98 = vset.pattern.permute.xlu0 0
    %99 = vperm.xlu0 %98, %v77
    %v100 = vpop.permute.xlu0 %99
    %103 = vset.pattern.permute.xlu0 0
    %104 = vperm.xlu0 %103, %v78
    %v105 = vpop.permute.xlu0 %104
    %108 = vset.pattern.permute.xlu0 0
    %109 = vperm.xlu0 %108, %v79
    %v110 = vpop.permute.xlu0 %109
    %113 = vset.pattern.permute.xlu0 0
    %114 = vperm.xlu0 %113, %v80
    %v115 = vpop.permute.xlu0 %114
    %118 = vset.pattern.permute.xlu0 0
    %119 = vperm.xlu0 %118, %v81
    %v120 = vpop.permute.xlu0 %119
    %123 = vset.pattern.permute.xlu0 0
    %124 = vperm.xlu0 %123, %v82
    %v125 = vpop.permute.xlu0 %124
    %128 = vset.pattern.permute.xlu0 0
    %129 = vperm.xlu0 %128, %v83
    %v130 = vpop.permute.xlu0 %129
    %133 = vset.pattern.permute.xlu0 0
    %134 = vperm.xlu0 %133, %v84
    %v135 = vpop.permute.xlu0 %134
    %138 = vset.pattern.permute.xlu0 0
    %139 = vperm.xlu0 %138, %v85
    %v140 = vpop.permute.xlu0 %139
    %143 = vset.pattern.permute.xlu0 0
    %144 = vperm.xlu0 %143, %v86
    %v145 = vpop.permute.xlu0 %144
    %148 = vset.pattern.permute.xlu0 0
    %149 = vperm.xlu0 %148, %v87
    %v150 = vpop.permute.xlu0 %149
    %153 = vset.pattern.permute.xlu0 0
    %154 = vperm.xlu0 %153, %v88
    %v155 = vpop.permute.xlu0 %154
    %158 = vset.pattern.permute.xlu0 0
    %159 = vperm.xlu0 %158, %v89
    %v160 = vpop.permute.xlu0 %159
    %163 = vset.pattern.permute.xlu0 0
    %164 = vperm.xlu0 %163, %v90
    %v165 = vpop.permute.xlu0 %164
    %168 = vset.pattern.permute.xlu0 0
    %169 = vperm.xlu0 %168, %v91
    %v170 = vpop.permute.xlu0 %169
    %v188 = vunpack.c.l.b16 %v60
    %v189 = vunpack.c.l.b16 %v61
    %v190 = vunpack.c.l.b16 %v62
    %v191 = vunpack.c.l.b16 %v63
    %v192 = vunpack.c.l.b16 %v64
    %v193 = vunpack.c.l.b16 %v65
    %v194 = vunpack.c.l.b16 %v66
    %v195 = vunpack.c.l.b16 %v67
    %v196 = vunpack.c.l.b16 %v68
    %v197 = vunpack.c.l.b16 %v69
    %v198 = vunpack.c.l.b16 %v70
    %v199 = vunpack.c.l.b16 %v71
    %v200 = vunpack.c.l.b16 %v72
    %v201 = vunpack.c.l.b16 %v73
    %v202 = vunpack.c.l.b16 %v74
    %v203 = vunpack.c.l.b16 %v75
    %v204 = vpack.c.b16 %v189, %v188
    %v205 = vpack.c.b16 %v191, %v190
    %v206 = vpack.c.b16 %v193, %v192
    %v207 = vpack.c.b16 %v195, %v194
    %v208 = vpack.c.b16 %v197, %v196
    %v209 = vpack.c.b16 %v199, %v198
    %v210 = vpack.c.b16 %v201, %v200
    %v211 = vpack.c.b16 %v203, %v202
    %vm212 = vcmask 130048
    %v214 = vsel %vm212, %v204, 0
    %v217 = vsel %vm212, %v205, 0
    %v220 = vsel %vm212, %v206, 0
    %v223 = vsel %vm212, %v207, 0
    %v226 = vsel %vm212, %v208, 0
    %v229 = vsel %vm212, %v209, 0
    %v232 = vsel %vm212, %v210, 0
    %v235 = vsel %vm212, %v211, 0
    %v238 = vsel %vm212, %v52, 0
    %v241 = vsel %vm212, %v53, 0
    %v244 = vsel %vm212, %v54, 0
    %v247 = vsel %vm212, %v55, 0
    %v250 = vsel %vm212, %v56, 0
    %v253 = vsel %vm212, %v57, 0
    %v256 = vsel %vm212, %v58, 0
    %v259 = vsel %vm212, %v59, 0
    %261 = vmatprep.subr.bf16.mxu0 0
    %262 = vmatpush1.bf16.xpose.msra.mxu0 %v238
    %263 = vmatprep.subr.bf16.mxu0 0
    %264 = vmatpush1.bf16.xpose.msra.mxu0 %v241
    %265 = vmatprep.subr.bf16.mxu0 0
    %266 = vmatpush1.bf16.xpose.msra.mxu0 %v244
    %267 = vmatprep.subr.bf16.mxu0 0
    %268 = vmatpush1.bf16.xpose.msra.mxu0 %v247
    %269 = vmatprep.subr.bf16.mxu0 0
    %270 = vmatpush1.bf16.xpose.msra.mxu0 %v250
    %271 = vmatprep.subr.bf16.mxu0 0
    %272 = vmatpush1.bf16.xpose.msra.mxu0 %v253
    %273 = vmatprep.subr.bf16.mxu0 0
    %274 = vmatpush1.bf16.xpose.msra.mxu0 %v256
    %275 = vmatprep.subr.bf16.mxu0 0
    %276 = vmatpush1.bf16.xpose.msra.mxu0 %v259
    %277 = vmatprep.subr.bf16.mxu0 0
    %278 = vmatpush1.bf16.xpose.msra.mxu0 0
    %279 = vmatprep.subr.bf16.mxu0 0
    %280 = vmatpush1.bf16.xpose.msra.mxu0 0
    %281 = vmatprep.subr.bf16.mxu0 0
    %282 = vmatpush1.bf16.xpose.msra.mxu0 0
    %283 = vmatprep.subr.bf16.mxu0 0
    %284 = vmatpush1.bf16.xpose.msra.mxu0 0
    %285 = vmatprep.subr.bf16.mxu0 0
    %286 = vmatpush1.bf16.xpose.msra.mxu0 0
    %287 = vmatprep.subr.bf16.mxu0 0
    %288 = vmatpush1.bf16.xpose.msra.mxu0 0
    %289 = vmatprep.subr.bf16.mxu0 0
    %290 = vmatpush1.bf16.xpose.msra.mxu0 0
    %291 = vmatprep.subr.bf16.mxu0 0
    %292 = vmatpush1.bf16.xpose.msra.mxu0 0
    %293 = vmatprep.mubr.bf16.mxu0 0
    %294 = vmatmul.mubr.bf16.gmra.mrb[0].mxu0 %v214
    %v295 = vpop.f32.mrb[0].mxu0
    %v296 = vadd.f32 %v95, %v295
    %v297 = vpop.f32.mrb[0].mxu0
    %v298 = vpop.f32.mrb[0].mxu0
    %v299 = vadd.f32 %v100, %v298
    %v300 = vpop.f32.mrb[0].mxu0
    %301 = vmatprep.mubr.bf16.mxu0 0
    %302 = vmatmul.mubr.bf16.gmra.mrb[0].mxu0 %v217
    %v303 = vpop.f32.mrb[0].mxu0
    %v304 = vadd.f32 %v105, %v303
    %v305 = vpop.f32.mrb[0].mxu0
    %v306 = vpop.f32.mrb[0].mxu0
    %v307 = vadd.f32 %v110, %v306
    %v308 = vpop.f32.mrb[0].mxu0
    %309 = vmatprep.mubr.bf16.mxu0 0
    %310 = vmatmul.mubr.bf16.gmra.mrb[0].mxu0 %v220
    %v311 = vpop.f32.mrb[0].mxu0
    %v312 = vadd.f32 %v115, %v311
    %v313 = vpop.f32.mrb[0].mxu0
    %v314 = vpop.f32.mrb[0].mxu0
    %v315 = vadd.f32 %v120, %v314
    %v316 = vpop.f32.mrb[0].mxu0
    %317 = vmatprep.mubr.bf16.mxu0 0
    %318 = vmatmul.mubr.bf16.gmra.mrb[0].mxu0 %v223
    %v319 = vpop.f32.mrb[0].mxu0
    %v320 = vadd.f32 %v125, %v319
    %v321 = vpop.f32.mrb[0].mxu0
    %v322 = vpop.f32.mrb[0].mxu0
    %v323 = vadd.f32 %v130, %v322
    %v324 = vpop.f32.mrb[0].mxu0
    %325 = vmatprep.mubr.bf16.mxu0 0
    %326 = vmatmul.mubr.bf16.gmra.mrb[0].mxu0 %v226
    %v327 = vpop.f32.mrb[0].mxu0
    %v328 = vadd.f32 %v135, %v327
    %v329 = vpop.f32.mrb[0].mxu0
    %v330 = vpop.f32.mrb[0].mxu0
    %v331 = vadd.f32 %v140, %v330
    %v332 = vpop.f32.mrb[0].mxu0
    %333 = vmatprep.mubr.bf16.mxu0 0
    %334 = vmatmul.mubr.bf16.gmra.mrb[0].mxu0 %v229
    %v335 = vpop.f32.mrb[0].mxu0
    %v336 = vadd.f32 %v145, %v335
    %v337 = vpop.f32.mrb[0].mxu0
    %v338 = vpop.f32.mrb[0].mxu0
    %v339 = vadd.f32 %v150, %v338
    %v340 = vpop.f32.mrb[0].mxu0
    %341 = vmatprep.mubr.bf16.mxu0 0
    %342 = vmatmul.mubr.bf16.gmra.mrb[0].mxu0 %v232
    %v343 = vpop.f32.mrb[0].mxu0
    %v344 = vadd.f32 %v155, %v343
    %v345 = vpop.f32.mrb[0].mxu0
    %v346 = vpop.f32.mrb[0].mxu0
    %v347 = vadd.f32 %v160, %v346
    %v348 = vpop.f32.mrb[0].mxu0
    %349 = vmatprep.mubr.bf16.mxu0 0
    %350 = vmatmul.mubr.bf16.gmra.mrb[0].mxu0 %v235
    %v351 = vpop.f32.mrb[0].mxu0
    %v352 = vadd.f32 %v165, %v351
    %v353 = vpop.f32.mrb[0].mxu0
    %v354 = vpop.f32.mrb[0].mxu0
    %v355 = vadd.f32 %v170, %v354
    %v356 = vpop.f32.mrb[0].mxu0
    %357 = vdwg.mxu0
    %v358 = vmax.f32 %v296, 0.0
    %v359 = vmax.f32 %v299, 0.0
    %v360 = vmax.f32 %v304, 0.0
    %v361 = vmax.f32 %v307, 0.0
    %v362 = vmax.f32 %v312, 0.0
    %v363 = vmax.f32 %v315, 0.0
    %v364 = vmax.f32 %v320, 0.0
    %v365 = vmax.f32 %v323, 0.0
    %v366 = vmax.f32 %v328, 0.0
    %v367 = vmax.f32 %v331, 0.0
    %v368 = vmax.f32 %v336, 0.0
    %v369 = vmax.f32 %v339, 0.0
    %v370 = vmax.f32 %v344, 0.0
    %v371 = vmax.f32 %v347, 0.0
    %v372 = vmax.f32 %v352, 0.0
    %v373 = vmax.f32 %v355, 0.0
    %v374 = vld [vmem:[%s3] sm:$0xf]
    %v375 = vld [vmem:[%s3 + $0x4] sm:$0xf]
    %v376 = vld [vmem:[%s3 + $0x8] sm:$0xf]
    %v377 = vld [vmem:[%s3 + $0xc] sm:$0xf]
    %v378 = vld [vmem:[%s3 + $0x10] sm:$0xf]
    %v379 = vld [vmem:[%s3 + $0x14] sm:$0xf]
    %v380 = vld [vmem:[%s3 + $0x18] sm:$0xf]
    %v381 = vld [vmem:[%s3 + $0x1c] sm:$0xf]
    %v382 = vpack.c.bf16 %v359, %v358
    %v383 = vpack.c.bf16 %v361, %v360
    %v384 = vpack.c.bf16 %v363, %v362
    %v385 = vpack.c.bf16 %v365, %v364
    %v386 = vpack.c.bf16 %v367, %v366
    %v387 = vpack.c.bf16 %v369, %v368
    %v388 = vpack.c.bf16 %v371, %v370
    %v389 = vpack.c.bf16 %v373, %v372
    %v390 = vld [vmem:[%s4] sm:$0xff]
    %v391 = vld [vmem:[%s4 + $0x8] sm:$0xff]
    %v392 = vld [vmem:[%s4 + $0x10] sm:$0xff]
    %v393 = vld [vmem:[%s4 + $0x18] sm:$0xff]
    %v394 = vld [vmem:[%s4 + $0x20] sm:$0xff]
    %v395 = vld [vmem:[%s4 + $0x28] sm:$0xff]
    %v396 = vld [vmem:[%s4 + $0x30] sm:$0xff]
    %v397 = vld [vmem:[%s4 + $0x38] sm:$0xff]
    %399 = vset.pattern.permute.xlu0 0
    %400 = vperm.xlu0 %399, %v390
    %v401 = vpop.permute.xlu0 %400
    %404 = vset.pattern.permute.xlu0 0
    %405 = vperm.xlu0 %404, %v391
    %v406 = vpop.permute.xlu0 %405
    %409 = vset.pattern.permute.xlu0 0
    %410 = vperm.xlu0 %409, %v392
    %v411 = vpop.permute.xlu0 %410
    %414 = vset.pattern.permute.xlu0 0
    %415 = vperm.xlu0 %414, %v393
    %v416 = vpop.permute.xlu0 %415
    %419 = vset.pattern.permute.xlu0 0
    %420 = vperm.xlu0 %419, %v394
    %v421 = vpop.permute.xlu0 %420
    %424 = vset.pattern.permute.xlu0 0
    %425 = vperm.xlu0 %424, %v395
    %v426 = vpop.permute.xlu0 %425
    %429 = vset.pattern.permute.xlu0 0
    %430 = vperm.xlu0 %429, %v396
    %v431 = vpop.permute.xlu0 %430
    %434 = vset.pattern.permute.xlu0 0
    %435 = vperm.xlu0 %434, %v397
    %v436 = vpop.permute.xlu0 %435
    %v446 = vunpack.c.l.b16 %v374
    %v447 = vunpack.c.l.b16 %v375
    %v448 = vunpack.c.l.b16 %v376
    %v449 = vunpack.c.l.b16 %v377
    %v450 = vunpack.c.l.b16 %v378
    %v451 = vunpack.c.l.b16 %v379
    %v452 = vunpack.c.l.b16 %v380
    %v453 = vunpack.c.l.b16 %v381
    %v454 = vpack.c.b16 %v447, %v446
    %v455 = vpack.c.b16 %v449, %v448
    %v456 = vpack.c.b16 %v451, %v450
    %v457 = vpack.c.b16 %v453, %v452
    %462 = vmatprep.subr.bf16.mxu0 0
    %463 = vmatpush1.bf16.msra.mxu0 %v382
    %464 = vmatprep.subr.bf16.mxu0 0
    %465 = vmatpush1.bf16.msra.mxu0 %v383
    %466 = vmatprep.subr.bf16.mxu0 0
    %467 = vmatpush1.bf16.msra.mxu0 %v384
    %468 = vmatprep.subr.bf16.mxu0 0
    %469 = vmatpush1.bf16.msra.mxu0 %v385
    %470 = vmatprep.subr.bf16.mxu0 0
    %471 = vmatpush1.bf16.msra.mxu0 %v386
    %472 = vmatprep.subr.bf16.mxu0 0
    %473 = vmatpush1.bf16.msra.mxu0 %v387
    %474 = vmatprep.subr.bf16.mxu0 0
    %475 = vmatpush1.bf16.msra.mxu0 %v388
    %476 = vmatprep.subr.bf16.mxu0 0
    %477 = vmatpush1.bf16.msra.mxu0 %v389
    %478 = vmatprep.subr.bf16.mxu0 0
    %479 = vmatpush1.bf16.msra.mxu0 0
    %480 = vmatprep.subr.bf16.mxu0 0
    %481 = vmatpush1.bf16.msra.mxu0 0
    %482 = vmatprep.subr.bf16.mxu0 0
    %483 = vmatpush1.bf16.msra.mxu0 0
    %484 = vmatprep.subr.bf16.mxu0 0
    %485 = vmatpush1.bf16.msra.mxu0 0
    %486 = vmatprep.subr.bf16.mxu0 0
    %487 = vmatpush1.bf16.msra.mxu0 0
    %488 = vmatprep.subr.bf16.mxu0 0
    %489 = vmatpush1.bf16.msra.mxu0 0
    %490 = vmatprep.subr.bf16.mxu0 0
    %491 = vmatpush1.bf16.msra.mxu0 0
    %492 = vmatprep.subr.bf16.mxu0 0
    %493 = vmatpush1.bf16.msra.mxu0 0
    %494 = vmatprep.mubr.bf16.mxu0 0
    %495 = vmatmul.mubr.bf16.gmra.mrb[0].mxu0 %v454
    %v496 = vpop.f32.mrb[0].mxu0
    %v497 = vadd.f32 %v401, %v496
    %v498 = vpop.f32.mrb[0].mxu0
    %v499 = vpop.f32.mrb[0].mxu0
    %v500 = vadd.f32 %v406, %v499
    %v501 = vpop.f32.mrb[0].mxu0
    %502 = vmatprep.mubr.bf16.mxu0 0
    %503 = vmatmul.mubr.bf16.gmra.mrb[0].mxu0 %v455
    %v504 = vpop.f32.mrb[0].mxu0
    %v505 = vadd.f32 %v411, %v504
    %v506 = vpop.f32.mrb[0].mxu0
    %v507 = vpop.f32.mrb[0].mxu0
    %v508 = vadd.f32 %v416, %v507
    %v509 = vpop.f32.mrb[0].mxu0
    %510 = vmatprep.mubr.bf16.mxu0 0
    %511 = vmatmul.mubr.bf16.gmra.mrb[0].mxu0 %v456
    %v512 = vpop.f32.mrb[0].mxu0
    %v513 = vadd.f32 %v421, %v512
    %v514 = vpop.f32.mrb[0].mxu0
    %v515 = vpop.f32.mrb[0].mxu0
    %v516 = vadd.f32 %v426, %v515
    %v517 = vpop.f32.mrb[0].mxu0
    %518 = vmatprep.mubr.bf16.mxu0 0
    %519 = vmatmul.mubr.bf16.gmra.mrb[0].mxu0 %v457
    %v520 = vpop.f32.mrb[0].mxu0
    %v521 = vadd.f32 %v431, %v520
    %v522 = vpop.f32.mrb[0].mxu0
    %v523 = vpop.f32.mrb[0].mxu0
    %v524 = vadd.f32 %v436, %v523
    %v525 = vpop.f32.mrb[0].mxu0
    %526 = vdwg.mxu0
    %v527 = vmax.f32 %v497, 0.0
    %v528 = vmax.f32 %v500, 0.0
    %v529 = vmax.f32 %v505, 0.0
    %v530 = vmax.f32 %v508, 0.0
    %v531 = vmax.f32 %v513, 0.0
    %v532 = vmax.f32 %v516, 0.0
    %v533 = vmax.f32 %v521, 0.0
    %v534 = vmax.f32 %v524, 0.0
    %v535 = vld [vmem:[%s5] sm:$0xf]
    %v536 = vld [vmem:[%s5 + $0x4] sm:$0xf]
    %v537 = vld [vmem:[%s5 + $0x8] sm:$0xf]
    %v538 = vld [vmem:[%s5 + $0xc] sm:$0xf]
    %v539 = vpack.c.bf16 %v528, %v527
    %v540 = vpack.c.bf16 %v530, %v529
    %v541 = vpack.c.bf16 %v532, %v531
    %v542 = vpack.c.bf16 %v534, %v533
    %v543 = vld [vmem:[%s6] sm:$0xff]
    %v544 = vld [vmem:[%s6 + $0x8] sm:$0xff]
    %v545 = vld [vmem:[%s6 + $0x10] sm:$0xff]
    %v546 = vld [vmem:[%s6 + $0x18] sm:$0xff]
    %548 = vset.pattern.permute.xlu0 0
    %549 = vperm.xlu0 %548, %v543
    %v550 = vpop.permute.xlu0 %549
    %553 = vset.pattern.permute.xlu0 0
    %554 = vperm.xlu0 %553, %v544
    %v555 = vpop.permute.xlu0 %554
    %558 = vset.pattern.permute.xlu0 0
    %559 = vperm.xlu0 %558, %v545
    %v560 = vpop.permute.xlu0 %559
    %563 = vset.pattern.permute.xlu0 0
    %564 = vperm.xlu0 %563, %v546
    %v565 = vpop.permute.xlu0 %564
    %v571 = vunpack.c.l.b16 %v535
    %v572 = vunpack.c.l.b16 %v536
    %v573 = vunpack.c.l.b16 %v537
    %v574 = vunpack.c.l.b16 %v538
    %v575 = vpack.c.b16 %v572, %v571
    %v576 = vpack.c.b16 %v574, %v573
    %vm577 = vcmask 523264
    %v579 = vsel %vm577, %v575, 0
    %v582 = vsel %vm577, %v576, 0
    %584 = vmatprep.subr.bf16.mxu0 0
    %585 = vmatpush1.bf16.msra.mxu0 %v539
    %586 = vmatprep.subr.bf16.mxu0 0
    %587 = vmatpush1.bf16.msra.mxu0 %v540
    %588 = vmatprep.subr.bf16.mxu0 0
    %589 = vmatpush1.bf16.msra.mxu0 %v541
    %590 = vmatprep.subr.bf16.mxu0 0
    %591 = vmatpush1.bf16.msra.mxu0 %v542
    %592 = vmatprep.subr.bf16.mxu0 0
    %593 = vmatpush1.bf16.msra.mxu0 0
    %594 = vmatprep.subr.bf16.mxu0 0
    %595 = vmatpush1.bf16.msra.mxu0 0
    %596 = vmatprep.subr.bf16.mxu0 0
    %597 = vmatpush1.bf16.msra.mxu0 0
    %598 = vmatprep.subr.bf16.mxu0 0
    %599 = vmatpush1.bf16.msra.mxu0 0
    %600 = vmatprep.subr.bf16.mxu0 0
    %601 = vmatpush1.bf16.msra.mxu0 0
    %602 = vmatprep.subr.bf16.mxu0 0
    %603 = vmatpush1.bf16.msra.mxu0 0
    %604 = vmatprep.subr.bf16.mxu0 0
    %605 = vmatpush1.bf16.msra.mxu0 0
    %606 = vmatprep.subr.bf16.mxu0 0
    %607 = vmatpush1.bf16.msra.mxu0 0
    %608 = vmatprep.subr.bf16.mxu0 0
    %609 = vmatpush1.bf16.msra.mxu0 0
    %610 = vmatprep.subr.bf16.mxu0 0
    %611 = vmatpush1.bf16.msra.mxu0 0
    %612 = vmatprep.subr.bf16.mxu0 0
    %613 = vmatpush1.bf16.msra.mxu0 0
    %614 = vmatprep.subr.bf16.mxu0 0
    %615 = vmatpush1.bf16.msra.mxu0 0
    %616 = vmatprep.mubr.bf16.mxu0 0
    %617 = vmatmul.mubr.bf16.gmra.mrb[0].mxu0 %v579
    %v618 = vpop.f32.mrb[0].mxu0
    %v619 = vadd.f32 %v550, %v618
    %v620 = vpop.f32.mrb[0].mxu0
    %v621 = vpop.f32.mrb[0].mxu0
    %v622 = vadd.f32 %v555, %v621
    %v623 = vpop.f32.mrb[0].mxu0
    %624 = vmatprep.mubr.bf16.mxu0 0
    %625 = vmatmul.mubr.bf16.gmra.mrb[0].mxu0 %v582
    %v626 = vpop.f32.mrb[0].mxu0
    %v627 = vadd.f32 %v560, %v626
    %v628 = vpop.f32.mrb[0].mxu0
    %v629 = vpop.f32.mrb[0].mxu0
    %v630 = vadd.f32 %v565, %v629
    %v631 = vpop.f32.mrb[0].mxu0
    %632 = vdwg.mxu0
    %v633 = vmax.f32 %v619, 0.0
    %v634 = vmax.f32 %v622, 0.0
    %v635 = vmax.f32 %v627, 0.0
    %v636 = vmax.f32 %v630, 0.0
    %v637 = vld [vmem:[%s7] sm:$0xff]
    %v638 = vld [vmem:[%s7 + $0x8] sm:$0xff]
    %v639 = vld [vmem:[%s7 + $0x10] sm:$0xff]
    %v640 = vld [vmem:[%s7 + $0x18] sm:$0xff]
    %642 = vset.pattern.permute.xlu0 0
    %643 = vperm.xlu0 %642, %v637
    %v644 = vpop.permute.xlu0 %643
    %647 = vset.pattern.permute.xlu0 0
    %648 = vperm.xlu0 %647, %v638
    %v649 = vpop.permute.xlu0 %648
    %652 = vset.pattern.permute.xlu0 0
    %653 = vperm.xlu0 %652, %v639
    %v654 = vpop.permute.xlu0 %653
    %657 = vset.pattern.permute.xlu0 0
    %658 = vperm.xlu0 %657, %v640
    %v659 = vpop.permute.xlu0 %658
    %v661 = vmul.f32 %v633, %v644
    %v662 = vmul.f32 %v634, %v649
    %v663 = vmul.f32 %v635, %v654
    %v664 = vmul.f32 %v636, %v659
    %v665 = vadd.f32 %v661, %v662
    %v666 = vadd.f32 %v665, %v663
    %v667 = vadd.f32 %v666, %v664
    %v668 = vrot.slane %v667, 4
    %v669 = vadd.f32 %v667, %v668
    %v670 = vrot.slane %v669, 2
    %v671 = vadd.f32 %v669, %v670
    %v672 = vrot.slane %v671, 1
    %v673 = vadd.f32 %v671, %v672
    %v674 = vld [vmem:[#allocation2] sm:$0x1]
    %676 = vset.pattern.permute.xlu0 0
    %677 = vperm.xlu0 %676, %v674
    %v678 = vpop.permute.xlu0 %677
    %v680 = vlaneseq
    %v681 = vshrl.u32 %v680, 7
    %v682 = vsub.s32 0, %v681
    %v683 = vrot.slane %v678, %v682
    %v684 = vadd.f32 %v673, %v683
    %685 = vst [vmem:[#allocation3] sm:$0x1] %v684
    // Predicated region
    $region38: #{tpu_custom_call.1} parent=1 // pred_check
      _
    $region39: #{tpu_custom_call.1} parent=1 // pred_check_branch
      %687 = sbr.rel (0) target = $region41
    $region40: #{tpu_custom_call.1} parent=1 // pred_region
      %s689 = ssub.s32 16, 16
      %690 = vsyncadd [#allocation4], %s689
      %s692 = sshll.u32 [#allocation3], 4
      %s693 = int_to_ptr.vmem [resolvable:$true] %s692
      %695 = dma.vmem_to_hbm [thread:$0]  %s693, 16, %s9, [#allocation4]
    $region41: #{tpu_custom_call.1} parent=1 // pred_fallthru
      _
    // Predicated region
    $region42: #{tpu_custom_call.1} parent=1 // pred_check
      _
    $region43: #{tpu_custom_call.1} parent=1 // pred_check_branch
      %697 = sbr.rel (0) target = $region45
    $region44: #{tpu_custom_call.1} parent=1 // pred_region
      %698 = dma.done [#allocation4], 16
    $region45: #{tpu_custom_call.1} parent=1 // pred_fallthru
      _
    %699 = vsyncpa [#allocation4], 1

</llo_original>
